<compile_context>
chip_gen: v5e
topology: v5e:2x2
jax: 0.10.0
libtpu: 0.0.40
codegen_flags: <defaults>
</compile_context>

<pallas_src>
import jax
import jax.numpy as jnp
from jax import lax
from jax.experimental import pallas as pl
from jax.experimental.pallas import tpu as pltpu

_LANE = 128
_MARGIN = 4 << 20  # fixed compiler-scratch headroom on top of accounted VMEM


def _round_up(n, m):
    return pl.cdiv(n, m) * m


def _vmem_budget_bytes():
    # ~75% of per-core VMEM; v5e/v6e (128 MiB) -> ~96 MiB, v7x (64 MiB) -> 48 MiB.
    cap = 64 << 20
    try:
        cap = int(getattr(pltpu.get_tpu_info(), "vmem_capacity_bytes", cap))
    except Exception:
        pass
    return int(min(max(int(0.75 * cap), 32 << 20), 112 << 20))


def mlp_kernel(x_ref, w1_ref, b1_ref, w2t_ref, b2_ref, o_ref):
    # Cast the streamed f32 x tile to the MXU feed dtype on the VPU (hidden under DMA).
    x = x_ref[...].astype(w1_ref.dtype)
    # fc1: (TB, Din) @ (Din, H) with f32 accumulation; bias + ReLU on the VPU in f32.
    h = jnp.dot(x, w1_ref[...], preferred_element_type=jnp.float32)
    h = jnp.maximum(h + b1_ref[...], 0.0).astype(w2t_ref.dtype)
    # fc2, transposed output: z^T = W2^T (Dout, H) x h (TB, H) contracted over H
    # -> (Dout, TB). Batch lands on the lane axis: lane-dense store, no Dout padding.
    zt = lax.dot_general(
        w2t_ref[...], h,
        dimension_numbers=(((1,), (1,)), ((), ())),
        preferred_element_type=jnp.float32,
    )
    zt = zt + b2_ref[...]  # (Dout, TB) + (Dout, 1), lane broadcast
    # Exact sigmoid with one EUP transcendental: sigmoid(z) = 0.5 * tanh(z/2) + 0.5.
    o_ref[...] = (0.5 * jnp.tanh(0.5 * zt) + 0.5).astype(o_ref.dtype)


def mlp_classifier_forward(x, w1, b1, w2, b2, *, block_b=512,
                           compute_dtype=jnp.float32):
    """x: (B, input_dim); weights stored as (in_features, out_features).

    Returns (B, output_dim) float32 == sigmoid(relu(x @ W1 + b1) @ W2 + b2).
    compute_dtype controls the MXU feed dtype (bf16 is valid on v5e/v6e/v7x; the
    elementwise tail and accumulation stay f32). x is *not* pre-cast in HBM.
    """
    B, Din = x.shape
    H = w1.shape[1]
    Dout = w2.shape[1]

    budget = _vmem_budget_bytes()
    x_bytes = jnp.dtype(x.dtype).itemsize
    c_bytes = jnp.dtype(compute_dtype).itemsize
    w_bytes = (Din * H + Dout * H) * c_bytes + (H + Dout) * 4

    def vmem_needed(tb):
        return (2 * tb * Din * x_bytes      # streamed x tiles (double-buffered)
                + 2 * Dout * tb * 4         # output tiles (double-buffered, f32)
                + 2 * w_bytes               # weights/biases (worst case 2 buffers)
                + 2 * tb * max(H, Din) * 4)  # live intermediates (cast x, h)

    # --- Batch tile selection -------------------------------------------------
    if B <= _LANE:
        # Tiny batch: one tile covering the whole batch; every block equals the
        # full array dims, so no padding / over-cover at all.
        TB = B
    else:
        TB = max(_LANE, _round_up(min(block_b, B), _LANE))
        # v7x megacore: give the "parallel" grid axis >= 2 steps when the batch allows.
        if pl.cdiv(B, TB) < 2:
            TB = max(_LANE, _round_up(pl.cdiv(B, 2), _LANE))
        # Shrink TB until double-buffered tiles + resident weights fit the VMEM budget.
        while TB > _LANE and vmem_needed(TB) + _MARGIN > budget:
            TB = max(_LANE, (TB // 2 // _LANE) * _LANE)

    vmem_limit = int(min(max(vmem_needed(TB) + _MARGIN, 32 << 20), budget))

    # TODO(synk): add a K-tiled path (grid axis over Din, "arbitrary", f32 VMEM
    # accumulator with pl.when init/finalize) for large input_dim where W1 no longer
    # fits the resident-weight budget (threshold halves on v7x's 64 MiB VMEM).

    # Weights are tiny: pre-cast / pre-transpose them in the wrapper (negligible HBM).
    w1_c = w1.astype(compute_dtype)                    # (Din, H)
    w2t_c = w2.T.astype(compute_dtype)                 # (Dout, H), pre-transposed
    b1_2d = b1.reshape(1, H).astype(jnp.float32)       # (1, H)
    b2_2d = b2.reshape(Dout, 1).astype(jnp.float32)    # (Dout, 1)

    grid = (pl.cdiv(B, TB),)

    def build(single_buffer_weights):
        wkw = {"pipeline_mode": pl.Buffered(1)} if single_buffer_weights else {}
        grid_spec = pltpu.PrefetchScalarGridSpec(
            num_scalar_prefetch=0,
            grid=grid,
            in_specs=[
                pl.BlockSpec((TB, Din), lambda i: (i, 0)),          # streamed x tile
                pl.BlockSpec((Din, H), lambda i: (0, 0), **wkw),    # W1 resident
                pl.BlockSpec((1, H), lambda i: (0, 0), **wkw),      # b1 resident
                pl.BlockSpec((Dout, H), lambda i: (0, 0), **wkw),   # W2^T resident
                pl.BlockSpec((Dout, 1), lambda i: (0, 0), **wkw),   # b2 resident
            ],
            out_specs=pl.BlockSpec((Dout, TB), lambda i: (0, i)),   # batch on lanes
        )
        return pl.pallas_call(
            mlp_kernel,
            out_shape=jax.ShapeDtypeStruct((Dout, B), jnp.float32),
            grid_spec=grid_spec,
            compiler_params=pltpu.CompilerParams(
                dimension_semantics=("parallel",),
                vmem_limit_bytes=vmem_limit,
            ),
        )

    try:
        out_t = build(True)(x, w1_c, b1_2d, w2t_c, b2_2d)
    except Exception:
        # Older/newer jax without Buffered(1) support: fall back to default
        # (double-buffered) weight blocks; only costs the dead second weight buffer.
        out_t = build(False)(x, w1_c, b1_2d, w2t_c, b2_2d)

    # Un-transpose the tiny (Dout, B) result back to (B, Dout).
    return out_t.T


def init_params(key, input_dim, hidden_dim, output_dim):
    # Deterministic init mimicking nn.Linear's U(-1/sqrt(fan_in), 1/sqrt(fan_in)).
    k1, k2, k3, k4 = jax.random.split(key, 4)
    bound1 = 1.0 / jnp.sqrt(input_dim)
    bound2 = 1.0 / jnp.sqrt(hidden_dim)
    w1 = jax.random.uniform(k1, (input_dim, hidden_dim), jnp.float32, -bound1, bound1)
    b1 = jax.random.uniform(k2, (hidden_dim,), jnp.float32, -bound1, bound1)
    w2 = jax.random.uniform(k3, (hidden_dim, output_dim), jnp.float32, -bound2, bound2)
    b2 = jax.random.uniform(k4, (output_dim,), jnp.float32, -bound2, bound2)
    return w1, b1, w2, b2


if __name__ == "__main__":
    B, input_dim, hidden_dim, output_dim = 8, 16, 32, 4

    key = jax.random.PRNGKey(0)
    kx, kp = jax.random.split(key)
    x = jax.random.normal(kx, (B, input_dim), jnp.float32)
    w1, b1, w2, b2 = init_params(kp, input_dim, hidden_dim, output_dim)

    # Pure-JAX reference (same math as the PyTorch forward).
    ref = jax.nn.sigmoid(jnp.maximum(x @ w1 + b1, 0.0) @ w2 + b2)

    # f32 MXU-feed path (exact sigmoid epilogue).
    out = jax.block_until_ready(mlp_classifier_forward(x, w1, b1, w2, b2))
    assert out.shape == (B, output_dim)
    assert jnp.allclose(out, ref, atol=2e-3, rtol=2e-3)

    # bf16 MXU-feed path (valid on v5e/v6e/v7x) — looser tolerance.
    out_bf16 = jax.block_until_ready(
        mlp_classifier_forward(x, w1, b1, w2, b2, compute_dtype=jnp.bfloat16))
    assert out_bf16.shape == (B, output_dim)
    assert jnp.allclose(out_bf16, ref, atol=3e-2, rtol=3e-2)

    print("KERNEL_OK")
</pallas_src>

<mosaic_0001>
module attributes {stable_mosaic.version = 11 : i64} {
  func.func @mlp_kernel(%arg0: i32, %arg1: memref<8x16xf32, #tpu.memory_space<vmem>>, %arg2: memref<16x32xf32, #tpu.memory_space<vmem>>, %arg3: memref<1x32xf32, #tpu.memory_space<vmem>>, %arg4: memref<4x32xf32, #tpu.memory_space<vmem>>, %arg5: memref<4x1xf32, #tpu.memory_space<vmem>>, %arg6: memref<4x8xf32, #tpu.memory_space<vmem>>) attributes {dimension_semantics = [#tpu.dimension_semantics<parallel>], iteration_bounds = array<i64: 1>, scalar_prefetch = 0 : i64, scratch_operands = 0 : i64, tpu.core_type = #tpu.core_type<tc>, window_params = [{transform_indices = @transform_0, window_bounds = array<i64: 8, 16>}, {pipeline_mode = #tpu.pipeline_mode<synchronous>, transform_indices = @transform_1, window_bounds = array<i64: 16, 32>}, {pipeline_mode = #tpu.pipeline_mode<synchronous>, transform_indices = @transform_2, window_bounds = array<i64: 1, 32>}, {pipeline_mode = #tpu.pipeline_mode<synchronous>, transform_indices = @transform_3, window_bounds = array<i64: 4, 32>}, {pipeline_mode = #tpu.pipeline_mode<synchronous>, transform_indices = @transform_4, window_bounds = array<i64: 4, 1>}, {transform_indices = @transform_5, window_bounds = array<i64: 4, 8>}]} {
    %c0 = arith.constant 0 : index
    %c0_0 = arith.constant 0 : index
    %0 = vector.load %arg1[%c0, %c0_0] : memref<8x16xf32, #tpu.memory_space<vmem>>, vector<8x16xf32>
    %c0_1 = arith.constant 0 : index
    %c0_2 = arith.constant 0 : index
    %1 = vector.load %arg2[%c0_1, %c0_2] : memref<16x32xf32, #tpu.memory_space<vmem>>, vector<16x32xf32>
    %cst = arith.constant dense<0.000000e+00> : vector<8x32xf32>
    %2 = tpu.matmul %0, %1, %cst {dimension_numbers = #tpu.dot_dimension_numbers<[1], [0], [0], [1], [0, 0, 1, 1], [], []>} : vector<8x16xf32>, vector<16x32xf32>, vector<8x32xf32> -> vector<8x32xf32>
    %c0_3 = arith.constant 0 : index
    %c0_4 = arith.constant 0 : index
    %3 = vector.load %arg3[%c0_3, %c0_4] : memref<1x32xf32, #tpu.memory_space<vmem>>, vector<1x32xf32>
    %4 = vector.broadcast %3 : vector<1x32xf32> to vector<8x32xf32>
    %5 = arith.addf %2, %4 : vector<8x32xf32>
    %cst_5 = arith.constant 0.000000e+00 : f32
    %6 = vector.broadcast %cst_5 : f32 to vector<8x32xf32>
    %7 = arith.maximumf %5, %6 : vector<8x32xf32>
    %c0_6 = arith.constant 0 : index
    %c0_7 = arith.constant 0 : index
    %8 = vector.load %arg4[%c0_6, %c0_7] : memref<4x32xf32, #tpu.memory_space<vmem>>, vector<4x32xf32>
    %cst_8 = arith.constant dense<0.000000e+00> : vector<4x8xf32>
    %9 = tpu.matmul %8, %7, %cst_8 {dimension_numbers = #tpu.dot_dimension_numbers<[1], [1], [0], [0], [0, 0, 1, 0], [], []>} : vector<4x32xf32>, vector<8x32xf32>, vector<4x8xf32> -> vector<4x8xf32>
    %c0_9 = arith.constant 0 : index
    %c0_10 = arith.constant 0 : index
    %10 = vector.load %arg5[%c0_9, %c0_10] : memref<4x1xf32, #tpu.memory_space<vmem>>, vector<4x1xf32>
    %11 = vector.broadcast %10 : vector<4x1xf32> to vector<4x8xf32>
    %12 = arith.addf %9, %11 : vector<4x8xf32>
    %cst_11 = arith.constant 5.000000e-01 : f32
    %13 = vector.broadcast %cst_11 : f32 to vector<4x8xf32>
    %14 = arith.mulf %13, %12 : vector<4x8xf32>
    %15 = math.tanh %14 : vector<4x8xf32>
    %cst_12 = arith.constant 5.000000e-01 : f32
    %16 = vector.broadcast %cst_12 : f32 to vector<4x8xf32>
    %17 = arith.mulf %16, %15 : vector<4x8xf32>
    %cst_13 = arith.constant 5.000000e-01 : f32
    %18 = vector.broadcast %cst_13 : f32 to vector<4x8xf32>
    %19 = arith.addf %17, %18 : vector<4x8xf32>
    %c0_14 = arith.constant 0 : index
    %c0_15 = arith.constant 0 : index
    %20 = vector.load %arg6[%c0_14, %c0_15] : memref<4x8xf32, #tpu.memory_space<vmem>>, vector<4x8xf32>
    tpu.vector_store %arg6[%c0_14, %c0_15], %19 {strides = array<i32>} : memref<4x8xf32, #tpu.memory_space<vmem>>, vector<4x8xf32>,
    return
  }
  func.func @transform_0(%arg0: i32) -> (i32, i32) {
    %c0_i32 = arith.constant 0 : i32
    %c0_i32_0 = arith.constant 0 : i32
    return %arg0, %c0_i32 : i32, i32
  }
  func.func @transform_1(%arg0: i32) -> (i32, i32) {
    %c0_i32 = arith.constant 0 : i32
    %c0_i32_0 = arith.constant 0 : i32
    %c0_i32_1 = arith.constant 0 : i32
    return %c0_i32, %c0_i32_0 : i32, i32
  }
  func.func @transform_2(%arg0: i32) -> (i32, i32) {
    %c0_i32 = arith.constant 0 : i32
    %c0_i32_0 = arith.constant 0 : i32
    %c0_i32_1 = arith.constant 0 : i32
    return %c0_i32, %c0_i32_0 : i32, i32
  }
  func.func @transform_3(%arg0: i32) -> (i32, i32) {
    %c0_i32 = arith.constant 0 : i32
    %c0_i32_0 = arith.constant 0 : i32
    %c0_i32_1 = arith.constant 0 : i32
    return %c0_i32, %c0_i32_0 : i32, i32
  }
  func.func @transform_4(%arg0: i32) -> (i32, i32) {
    %c0_i32 = arith.constant 0 : i32
    %c0_i32_0 = arith.constant 0 : i32
    %c0_i32_1 = arith.constant 0 : i32
    return %c0_i32, %c0_i32_0 : i32, i32
  }
  func.func @transform_5(%arg0: i32) -> (i32, i32) {
    %c0_i32 = arith.constant 0 : i32
    %c0_i32_0 = arith.constant 0 : i32
    return %c0_i32, %arg0 : i32, i32
  }
}

module attributes {stable_mosaic.version = 11 : i64} {
  func.func @mlp_kernel(%arg0: i32, %arg1: memref<8x16xf32, #tpu.memory_space<vmem>>, %arg2: memref<16x32xf32, #tpu.memory_space<vmem>>, %arg3: memref<1x32xf32, #tpu.memory_space<vmem>>, %arg4: memref<4x32xf32, #tpu.memory_space<vmem>>, %arg5: memref<4x1xf32, #tpu.memory_space<vmem>>, %arg6: memref<4x8xf32, #tpu.memory_space<vmem>>) attributes {dimension_semantics = [#tpu.dimension_semantics<parallel>], iteration_bounds = array<i64: 1>, scalar_prefetch = 0 : i64, scratch_operands = 0 : i64, tpu.core_type = #tpu.core_type<tc>, window_params = [{transform_indices = @transform_0, window_bounds = array<i64: 8, 16>}, {pipeline_mode = #tpu.pipeline_mode<synchronous>, transform_indices = @transform_1, window_bounds = array<i64: 16, 32>}, {pipeline_mode = #tpu.pipeline_mode<synchronous>, transform_indices = @transform_2, window_bounds = array<i64: 1, 32>}, {pipeline_mode = #tpu.pipeline_mode<synchronous>, transform_indices = @transform_3, window_bounds = array<i64: 4, 32>}, {pipeline_mode = #tpu.pipeline_mode<synchronous>, transform_indices = @transform_4, window_bounds = array<i64: 4, 1>}, {transform_indices = @transform_5, window_bounds = array<i64: 4, 8>}]} {
    %c0 = arith.constant 0 : index
    %c0_0 = arith.constant 0 : index
    %0 = vector.load %arg1[%c0, %c0_0] : memref<8x16xf32, #tpu.memory_space<vmem>>, vector<8x16xf32>
    %c0_1 = arith.constant 0 : index
    %c0_2 = arith.constant 0 : index
    %1 = vector.load %arg2[%c0_1, %c0_2] : memref<16x32xf32, #tpu.memory_space<vmem>>, vector<16x32xf32>
    %cst = arith.constant dense<0.000000e+00> : vector<8x32xf32>
    %2 = tpu.matmul %0, %1, %cst {dimension_numbers = #tpu.dot_dimension_numbers<[1], [0], [0], [1], [0, 0, 1, 1], [], []>} : vector<8x16xf32>, vector<16x32xf32>, vector<8x32xf32> -> vector<8x32xf32>
    %c0_3 = arith.constant 0 : index
    %c0_4 = arith.constant 0 : index
    %3 = vector.load %arg3[%c0_3, %c0_4] : memref<1x32xf32, #tpu.memory_space<vmem>>, vector<1x32xf32>
    %4 = vector.broadcast %3 : vector<1x32xf32> to vector<8x32xf32>
    %5 = arith.addf %2, %4 : vector<8x32xf32>
    %cst_5 = arith.constant 0.000000e+00 : f32
    %6 = vector.broadcast %cst_5 : f32 to vector<8x32xf32>
    %7 = arith.maximumf %5, %6 : vector<8x32xf32>
    %c0_6 = arith.constant 0 : index
    %c0_7 = arith.constant 0 : index
    %8 = vector.load %arg4[%c0_6, %c0_7] : memref<4x32xf32, #tpu.memory_space<vmem>>, vector<4x32xf32>
    %cst_8 = arith.constant dense<0.000000e+00> : vector<4x8xf32>
    %9 = tpu.matmul %8, %7, %cst_8 {dimension_numbers = #tpu.dot_dimension_numbers<[1], [1], [0], [0], [0, 0, 1, 0], [], []>} : vector<4x32xf32>, vector<8x32xf32>, vector<4x8xf32> -> vector<4x8xf32>
    %c0_9 = arith.constant 0 : index
    %c0_10 = arith.constant 0 : index
    %10 = vector.load %arg5[%c0_9, %c0_10] : memref<4x1xf32, #tpu.memory_space<vmem>>, vector<4x1xf32>
    %11 = vector.broadcast %10 : vector<4x1xf32> to vector<4x8xf32>
    %12 = arith.addf %9, %11 : vector<4x8xf32>
    %cst_11 = arith.constant 5.000000e-01 : f32
    %13 = vector.broadcast %cst_11 : f32 to vector<4x8xf32>
    %14 = arith.mulf %13, %12 : vector<4x8xf32>
    %15 = math.tanh %14 : vector<4x8xf32>
    %cst_12 = arith.constant 5.000000e-01 : f32
    %16 = vector.broadcast %cst_12 : f32 to vector<4x8xf32>
    %17 = arith.mulf %16, %15 : vector<4x8xf32>
    %cst_13 = arith.constant 5.000000e-01 : f32
    %18 = vector.broadcast %cst_13 : f32 to vector<4x8xf32>
    %19 = arith.addf %17, %18 : vector<4x8xf32>
    %c0_14 = arith.constant 0 : index
    %c0_15 = arith.constant 0 : index
    %20 = vector.load %arg6[%c0_14, %c0_15] : memref<4x8xf32, #tpu.memory_space<vmem>>, vector<4x8xf32>
    tpu.vector_store %arg6[%c0_14, %c0_15], %19 {strides = array<i32>} : memref<4x8xf32, #tpu.memory_space<vmem>>, vector<4x8xf32>,
    return
  }
  func.func @transform_0(%arg0: i32) -> (i32, i32) {
    %c0_i32 = arith.constant 0 : i32
    %c0_i32_0 = arith.constant 0 : i32
    return %arg0, %c0_i32 : i32, i32
  }
  func.func @transform_1(%arg0: i32) -> (i32, i32) {
    %c0_i32 = arith.constant 0 : i32
    %c0_i32_0 = arith.constant 0 : i32
    %c0_i32_1 = arith.constant 0 : i32
    return %c0_i32, %c0_i32_0 : i32, i32
  }
  func.func @transform_2(%arg0: i32) -> (i32, i32) {
    %c0_i32 = arith.constant 0 : i32
    %c0_i32_0 = arith.constant 0 : i32
    %c0_i32_1 = arith.constant 0 : i32
    return %c0_i32, %c0_i32_0 : i32, i32
  }
  func.func @transform_3(%arg0: i32) -> (i32, i32) {
    %c0_i32 = arith.constant 0 : i32
    %c0_i32_0 = arith.constant 0 : i32
    %c0_i32_1 = arith.constant 0 : i32
    return %c0_i32, %c0_i32_0 : i32, i32
  }
  func.func @transform_4(%arg0: i32) -> (i32, i32) {
    %c0_i32 = arith.constant 0 : i32
    %c0_i32_0 = arith.constant 0 : i32
    %c0_i32_1 = arith.constant 0 : i32
    return %c0_i32, %c0_i32_0 : i32, i32
  }
  func.func @transform_5(%arg0: i32) -> (i32, i32) {
    %c0_i32 = arith.constant 0 : i32
    %c0_i32_0 = arith.constant 0 : i32
    return %c0_i32, %arg0 : i32, i32
  }
}

</mosaic_0001>

<llo_original>
// kernel: tpu_custom_call.1
$region0: #{tpu_custom_call.1}
  #allocation0 [shape = 'u32[]', space=smem, size = 0x4, offset = 0x4, fixed_abs, tag = 'smem constant byte address 0x4 - core index']
  #allocation1 [shape = 'u32[72,128]{1,0:T(1,128)}', space=vmem, size = 0x9000, scoped, tag = 'internal scratch']
  %s0 = inlined_call_operand.hbm [shape: f32[8,16], index: 0, kind: input, shape index: {}]
  %s1 = inlined_call_operand.hbm [shape: f32[16,32], index: 1, kind: input, shape index: {}]
  %s2 = inlined_call_operand.vmem [shape: f32[1,32], index: 2, kind: input, shape index: {}]
  %s3 = inlined_call_operand.vmem [shape: f32[4,32], index: 3, kind: input, shape index: {}]
  %s4 = inlined_call_operand.vmem [shape: f32[4,1], index: 4, kind: input, shape index: {}]
  %s5 = inlined_call_operand.hbm [shape: f32[4,8], index: 5, kind: output, shape index: {}]
  %s6 = sld [smem:[#allocation0]]
  $region38: #{tpu_custom_call.1} parent=0
    _
  %s8 = ssub.s32 1, %s6
  %s9 = scalar_select 0, %s8, %s6
  $region1: #{tpu_custom_call.1} parent=0
    #allocation2 [shape = 'u8[4096]{0}', space=vmem, size = 0x1000, scoped, tag = 'input window, operand 0, single buffered']
    #allocation3 [shape = 's32[1]{0}', space=sflag, size = 0x4, scoped, tag = 'scoped memory for tpu_custom_call.1']
    #allocation4 [shape = 's32[1]{0}', space=sflag, size = 0x4, scoped, tag = 'scoped memory for tpu_custom_call.1']
    #allocation5 [shape = 'u8[8192]{0}', space=vmem, size = 0x2000, scoped, tag = 'input window, operand 1, single buffered']
    #allocation6 [shape = 's32[1]{0}', space=sflag, size = 0x4, scoped, tag = 'scoped memory for tpu_custom_call.1']
    #allocation7 [shape = 'u8[2048]{0}', space=vmem, size = 0x800, scoped, tag = 'output window, operand 0, single buffered']
    %10 = vsyncpa [#allocation3], 0
    %11 = vsyncpa [#allocation6], 0
    %12 = vsyncpa [#allocation4], 0
    // Predicated region
    $region2: #{tpu_custom_call.1} parent=1 // pred_check
      _
    $region3: #{tpu_custom_call.1} parent=1 // pred_check_branch
      %14 = sbr.rel (0) target = $region5
    $region4: #{tpu_custom_call.1} parent=1 // pred_region
      %16 = vsyncadd [#allocation3], 0
      %s18 = sshll.u32 %s0, 4
      %s19 = int_to_ptr.hbm [resolvable:$true] %s18
      %s20 = sshll.u32 [#allocation2], 4
      %s21 = int_to_ptr.vmem [resolvable:$true] %s20
      %23 = dma.hbm_to_vmem [thread:$0]  %s19, 128, %s21, [#allocation3]
    $region5: #{tpu_custom_call.1} parent=1 // pred_fallthru
      _
    // Predicated region
    $region6: #{tpu_custom_call.1} parent=1 // pred_check
      _
    $region7: #{tpu_custom_call.1} parent=1 // pred_check_branch
      %25 = sbr.rel (0) target = $region9
    $region8: #{tpu_custom_call.1} parent=1 // pred_region
      %27 = vsyncadd [#allocation6], 0
      %s28 = sshll.u32 %s1, 4
      %s29 = int_to_ptr.hbm [resolvable:$true] %s28
      %s30 = sshll.u32 [#allocation5], 4
      %s31 = int_to_ptr.vmem [resolvable:$true] %s30
      %36 = dma.hbm_to_vmem [thread:$0]  %s29, 256, %s31, [#allocation6], 128, 128, 8
    $region9: #{tpu_custom_call.1} parent=1 // pred_fallthru
      _
    // Predicated region
    $region10: #{tpu_custom_call.1} parent=1 // pred_check
      _
    $region11: #{tpu_custom_call.1} parent=1 // pred_check_branch
      %38 = sbr.rel (0) target = $region13
    $region12: #{tpu_custom_call.1} parent=1 // pred_region
      _
    $region13: #{tpu_custom_call.1} parent=1 // pred_fallthru
      _
    // Predicated region
    $region14: #{tpu_custom_call.1} parent=1 // pred_check
      _
    $region15: #{tpu_custom_call.1} parent=1 // pred_check_branch
      %40 = sbr.rel (0) target = $region17
    $region16: #{tpu_custom_call.1} parent=1 // pred_region
      _
    $region17: #{tpu_custom_call.1} parent=1 // pred_fallthru
      _
    // Predicated region
    $region18: #{tpu_custom_call.1} parent=1 // pred_check
      _
    $region19: #{tpu_custom_call.1} parent=1 // pred_check_branch
      %42 = sbr.rel (0) target = $region21
    $region20: #{tpu_custom_call.1} parent=1 // pred_region
      _
    $region21: #{tpu_custom_call.1} parent=1 // pred_fallthru
      _
    // Predicated region
    $region22: #{tpu_custom_call.1} parent=1 // pred_check
      _
    $region23: #{tpu_custom_call.1} parent=1 // pred_check_branch
      %44 = sbr.rel (0) target = $region25
    $region24: #{tpu_custom_call.1} parent=1 // pred_region
      %46 = dma.done [#allocation3], 128
    $region25: #{tpu_custom_call.1} parent=1 // pred_fallthru
      _
    // Predicated region
    $region26: #{tpu_custom_call.1} parent=1 // pred_check
      _
    $region27: #{tpu_custom_call.1} parent=1 // pred_check_branch
      %48 = sbr.rel (0) target = $region29
    $region28: #{tpu_custom_call.1} parent=1 // pred_region
      %50 = dma.done [#allocation6], 256
    $region29: #{tpu_custom_call.1} parent=1 // pred_fallthru
      _
    %v51 = vld [vmem:[#allocation2] sm:$0xff]
    %v52 = vld [vmem:[#allocation5] sm:$0xff]
    %v53 = vld [vmem:[#allocation5 + $0x8] sm:$0xff]
    %v54 = vld [vmem:[%s2] sm:$0x1]
    %v56 = vperm.slane %v54, 0
    %vm58 = vcmask 130048
    %v60 = vsel %vm58, %v51, 0
    %62 = vmatpush.msra.mxu0 0.0
    %63 = vmatpush.msra.mxu0 0.0
    %64 = vmatpush.msra.mxu0 0.0
    %65 = vmatpush.msra.mxu0 0.0
    %66 = vmatpush.msra.mxu0 0.0
    %67 = vmatpush.msra.mxu0 0.0
    %68 = vmatpush.msra.mxu0 0.0
    %69 = vmatpush.msra.mxu0 0.0
    %70 = vmatpush.msra.mxu0 0.0
    %71 = vmatpush.msra.mxu0 0.0
    %72 = vmatpush.msra.mxu0 0.0
    %73 = vmatpush.msra.mxu0 0.0
    %74 = vmatpush.msra.mxu0 0.0
    %75 = vmatpush.msra.mxu0 0.0
    %76 = vmatpush.msra.mxu0 %v53
    %77 = vmatpush.msra.mxu0 %v52
    %78 = vmatmul.f32.gmra.mxu0 %v60
    %v79 = vpop.f32.mrf.mxu0
    %v80 = vadd.f32 %v56, %v79
    %81 = vdwg.mxu0
    %v82 = vmax.f32 %v80, 0.0
    %v83 = vld [vmem:[%s3] sm:$0xf]
    %v84 = vld [vmem:[%s4] sm:$0xf]
    %86 = vset.pattern.permute.xlu0 0
    %87 = vperm.xlu0 %86, %v84
    %v88 = vpop.permute.xlu0 %87
    %vm90 = vcmask 261120
    %v92 = vsel %vm90, %v83, 0
    %v95 = vsel %vm90, %v82, 0
    %97 = vmatpush.xpose.msra.mxu0 0.0
    %98 = vmatpush.xpose.msra.mxu0 0.0
    %99 = vmatpush.xpose.msra.mxu0 0.0
    %100 = vmatpush.xpose.msra.mxu0 0.0
    %101 = vmatpush.xpose.msra.mxu0 0.0
    %102 = vmatpush.xpose.msra.mxu0 0.0
    %103 = vmatpush.xpose.msra.mxu0 0.0
    %104 = vmatpush.xpose.msra.mxu0 0.0
    %105 = vmatpush.xpose.msra.mxu0 0.0
    %106 = vmatpush.xpose.msra.mxu0 0.0
    %107 = vmatpush.xpose.msra.mxu0 0.0
    %108 = vmatpush.xpose.msra.mxu0 0.0
    %109 = vmatpush.xpose.msra.mxu0 0.0
    %110 = vmatpush.xpose.msra.mxu0 0.0
    %111 = vmatpush.xpose.msra.mxu0 0.0
    %112 = vmatpush.xpose.msra.mxu0 %v95
    %113 = vmatmul.f32.gmra.mxu0 %v92
    %v114 = vpop.f32.mrf.mxu0
    %v115 = vadd.f32 %v88, %v114
    %116 = vdwg.mxu0
    %v117 = vmul.f32 %v115, 0.5
    %v118 = vtanh.pop %v117
    %v119 = vmul.f32 %v118, 0.5
    %v120 = vadd.f32 %v119, 0.5
    %vm121 = vcmask 60416
    %122 = vst.msk [vmem:[#allocation7] sm:$0xf] %vm121, %v120
    // Predicated region
    $region30: #{tpu_custom_call.1} parent=1 // pred_check
      _
    $region31: #{tpu_custom_call.1} parent=1 // pred_check_branch
      %124 = sbr.rel (0) target = $region33
    $region32: #{tpu_custom_call.1} parent=1 // pred_region
      %126 = vsyncadd [#allocation4], 0
      %s128 = sshll.u32 [#allocation7], 4
      %s129 = int_to_ptr.vmem [resolvable:$true] %s128
      %s130 = sshll.u32 %s5, 4
      %s131 = int_to_ptr.hbm [resolvable:$true] %s130
      %133 = dma.vmem_to_hbm [thread:$0]  %s129, 64, %s131, [#allocation4]
    $region33: #{tpu_custom_call.1} parent=1 // pred_fallthru
      _
    // Predicated region
    $region34: #{tpu_custom_call.1} parent=1 // pred_check
      _
    $region35: #{tpu_custom_call.1} parent=1 // pred_check_branch
      %135 = sbr.rel (0) target = $region37
    $region36: #{tpu_custom_call.1} parent=1 // pred_region
      %137 = dma.done [#allocation4], 64
    $region37: #{tpu_custom_call.1} parent=1 // pred_fallthru
      _
    %138 = vsyncpa [#allocation3], 1
    %139 = vsyncpa [#allocation6], 1
    %140 = vsyncpa [#allocation4], 1

// kernel: tpu_custom_call.1
$region0: #{tpu_custom_call.1}
  #allocation0 [shape = 'u32[]', space=smem, size = 0x4, offset = 0x4, fixed_abs, tag = 'smem constant byte address 0x4 - core index']
  #allocation1 [shape = 'u32[72,128]{1,0:T(1,128)}', space=vmem, size = 0x9000, scoped, tag = 'internal scratch']
  %s0 = inlined_call_operand.hbm [shape: f32[8,16], index: 0, kind: input, shape index: {}]
  %s1 = inlined_call_operand.hbm [shape: f32[16,32], index: 1, kind: input, shape index: {}]
  %s2 = inlined_call_operand.vmem [shape: f32[1,32], index: 2, kind: input, shape index: {}]
  %s3 = inlined_call_operand.vmem [shape: f32[4,32], index: 3, kind: input, shape index: {}]
  %s4 = inlined_call_operand.vmem [shape: f32[4,1], index: 4, kind: input, shape index: {}]
  %s5 = inlined_call_operand.hbm [shape: f32[4,8], index: 5, kind: output, shape index: {}]
  %s6 = sld [smem:[#allocation0]]
  $region38: #{tpu_custom_call.1} parent=0
    _
  %s8 = ssub.s32 1, %s6
  %s9 = scalar_select 0, %s8, %s6
  $region1: #{tpu_custom_call.1} parent=0
    #allocation2 [shape = 'u8[4096]{0}', space=vmem, size = 0x1000, scoped, tag = 'input window, operand 0, single buffered']
    #allocation3 [shape = 's32[1]{0}', space=sflag, size = 0x4, scoped, tag = 'scoped memory for tpu_custom_call.1']
    #allocation4 [shape = 's32[1]{0}', space=sflag, size = 0x4, scoped, tag = 'scoped memory for tpu_custom_call.1']
    #allocation5 [shape = 'u8[8192]{0}', space=vmem, size = 0x2000, scoped, tag = 'input window, operand 1, single buffered']
    #allocation6 [shape = 's32[1]{0}', space=sflag, size = 0x4, scoped, tag = 'scoped memory for tpu_custom_call.1']
    #allocation7 [shape = 'u8[2048]{0}', space=vmem, size = 0x800, scoped, tag = 'output window, operand 0, single buffered']
    %10 = vsyncpa [#allocation3], 0
    %11 = vsyncpa [#allocation6], 0
    %12 = vsyncpa [#allocation4], 0
    // Predicated region
    $region2: #{tpu_custom_call.1} parent=1 // pred_check
      _
    $region3: #{tpu_custom_call.1} parent=1 // pred_check_branch
      %14 = sbr.rel (0) target = $region5
    $region4: #{tpu_custom_call.1} parent=1 // pred_region
      %16 = vsyncadd [#allocation3], 0
      %s18 = sshll.u32 %s0, 4
      %s19 = int_to_ptr.hbm [resolvable:$true] %s18
      %s20 = sshll.u32 [#allocation2], 4
      %s21 = int_to_ptr.vmem [resolvable:$true] %s20
      %23 = dma.hbm_to_vmem [thread:$0]  %s19, 128, %s21, [#allocation3]
    $region5: #{tpu_custom_call.1} parent=1 // pred_fallthru
      _
    // Predicated region
    $region6: #{tpu_custom_call.1} parent=1 // pred_check
      _
    $region7: #{tpu_custom_call.1} parent=1 // pred_check_branch
      %25 = sbr.rel (0) target = $region9
    $region8: #{tpu_custom_call.1} parent=1 // pred_region
      %27 = vsyncadd [#allocation6], 0
      %s28 = sshll.u32 %s1, 4
      %s29 = int_to_ptr.hbm [resolvable:$true] %s28
      %s30 = sshll.u32 [#allocation5], 4
      %s31 = int_to_ptr.vmem [resolvable:$true] %s30
      %36 = dma.hbm_to_vmem [thread:$0]  %s29, 256, %s31, [#allocation6], 128, 128, 8
    $region9: #{tpu_custom_call.1} parent=1 // pred_fallthru
      _
    // Predicated region
    $region10: #{tpu_custom_call.1} parent=1 // pred_check
      _
    $region11: #{tpu_custom_call.1} parent=1 // pred_check_branch
      %38 = sbr.rel (0) target = $region13
    $region12: #{tpu_custom_call.1} parent=1 // pred_region
      _
    $region13: #{tpu_custom_call.1} parent=1 // pred_fallthru
      _
    // Predicated region
    $region14: #{tpu_custom_call.1} parent=1 // pred_check
      _
    $region15: #{tpu_custom_call.1} parent=1 // pred_check_branch
      %40 = sbr.rel (0) target = $region17
    $region16: #{tpu_custom_call.1} parent=1 // pred_region
      _
    $region17: #{tpu_custom_call.1} parent=1 // pred_fallthru
      _
    // Predicated region
    $region18: #{tpu_custom_call.1} parent=1 // pred_check
      _
    $region19: #{tpu_custom_call.1} parent=1 // pred_check_branch
      %42 = sbr.rel (0) target = $region21
    $region20: #{tpu_custom_call.1} parent=1 // pred_region
      _
    $region21: #{tpu_custom_call.1} parent=1 // pred_fallthru
      _
    // Predicated region
    $region22: #{tpu_custom_call.1} parent=1 // pred_check
      _
    $region23: #{tpu_custom_call.1} parent=1 // pred_check_branch
      %44 = sbr.rel (0) target = $region25
    $region24: #{tpu_custom_call.1} parent=1 // pred_region
      %46 = dma.done [#allocation3], 128
    $region25: #{tpu_custom_call.1} parent=1 // pred_fallthru
      _
    // Predicated region
    $region26: #{tpu_custom_call.1} parent=1 // pred_check
      _
    $region27: #{tpu_custom_call.1} parent=1 // pred_check_branch
      %48 = sbr.rel (0) target = $region29
    $region28: #{tpu_custom_call.1} parent=1 // pred_region
      %50 = dma.done [#allocation6], 256
    $region29: #{tpu_custom_call.1} parent=1 // pred_fallthru
      _
    %v51 = vld [vmem:[#allocation2] sm:$0xff]
    %v52 = vld [vmem:[#allocation5] sm:$0xff]
    %v53 = vld [vmem:[#allocation5 + $0x8] sm:$0xff]
    %v54 = vld [vmem:[%s2] sm:$0x1]
    %v56 = vperm.slane %v54, 0
    %vm58 = vcmask 130048
    %v60 = vsel %vm58, %v51, 0
    %62 = vmatpush.msra.mxu0 0.0
    %63 = vmatpush.msra.mxu0 0.0
    %64 = vmatpush.msra.mxu0 0.0
    %65 = vmatpush.msra.mxu0 0.0
    %66 = vmatpush.msra.mxu0 0.0
    %67 = vmatpush.msra.mxu0 0.0
    %68 = vmatpush.msra.mxu0 0.0
    %69 = vmatpush.msra.mxu0 0.0
    %70 = vmatpush.msra.mxu0 0.0
    %71 = vmatpush.msra.mxu0 0.0
    %72 = vmatpush.msra.mxu0 0.0
    %73 = vmatpush.msra.mxu0 0.0
    %74 = vmatpush.msra.mxu0 0.0
    %75 = vmatpush.msra.mxu0 0.0
    %76 = vmatpush.msra.mxu0 %v53
    %77 = vmatpush.msra.mxu0 %v52
    %78 = vmatmul.f32.gmra.mxu0 %v60
    %v79 = vpop.f32.mrf.mxu0
    %v80 = vadd.f32 %v56, %v79
    %81 = vdwg.mxu0
    %v82 = vmax.f32 %v80, 0.0
    %v83 = vld [vmem:[%s3] sm:$0xf]
    %v84 = vld [vmem:[%s4] sm:$0xf]
    %86 = vset.pattern.permute.xlu0 0
    %87 = vperm.xlu0 %86, %v84
    %v88 = vpop.permute.xlu0 %87
    %vm90 = vcmask 261120
    %v92 = vsel %vm90, %v83, 0
    %v95 = vsel %vm90, %v82, 0
    %97 = vmatpush.xpose.msra.mxu0 0.0
    %98 = vmatpush.xpose.msra.mxu0 0.0
    %99 = vmatpush.xpose.msra.mxu0 0.0
    %100 = vmatpush.xpose.msra.mxu0 0.0
    %101 = vmatpush.xpose.msra.mxu0 0.0
    %102 = vmatpush.xpose.msra.mxu0 0.0
    %103 = vmatpush.xpose.msra.mxu0 0.0
    %104 = vmatpush.xpose.msra.mxu0 0.0
    %105 = vmatpush.xpose.msra.mxu0 0.0
    %106 = vmatpush.xpose.msra.mxu0 0.0
    %107 = vmatpush.xpose.msra.mxu0 0.0
    %108 = vmatpush.xpose.msra.mxu0 0.0
    %109 = vmatpush.xpose.msra.mxu0 0.0
    %110 = vmatpush.xpose.msra.mxu0 0.0
    %111 = vmatpush.xpose.msra.mxu0 0.0
    %112 = vmatpush.xpose.msra.mxu0 %v95
    %113 = vmatmul.f32.gmra.mxu0 %v92
    %v114 = vpop.f32.mrf.mxu0
    %v115 = vadd.f32 %v88, %v114
    %116 = vdwg.mxu0
    %v117 = vmul.f32 %v115, 0.5
    %v118 = vtanh.pop %v117
    %v119 = vmul.f32 %v118, 0.5
    %v120 = vadd.f32 %v119, 0.5
    %vm121 = vcmask 60416
    %122 = vst.msk [vmem:[#allocation7] sm:$0xf] %vm121, %v120
    // Predicated region
    $region30: #{tpu_custom_call.1} parent=1 // pred_check
      _
    $region31: #{tpu_custom_call.1} parent=1 // pred_check_branch
      %124 = sbr.rel (0) target = $region33
    $region32: #{tpu_custom_call.1} parent=1 // pred_region
      %126 = vsyncadd [#allocation4], 0
      %s128 = sshll.u32 [#allocation7], 4
      %s129 = int_to_ptr.vmem [resolvable:$true] %s128
      %s130 = sshll.u32 %s5, 4
      %s131 = int_to_ptr.hbm [resolvable:$true] %s130
      %133 = dma.vmem_to_hbm [thread:$0]  %s129, 64, %s131, [#allocation4]
    $region33: #{tpu_custom_call.1} parent=1 // pred_fallthru
      _
    // Predicated region
    $region34: #{tpu_custom_call.1} parent=1 // pred_check
      _
    $region35: #{tpu_custom_call.1} parent=1 // pred_check_branch
      %135 = sbr.rel (0) target = $region37
    $region36: #{tpu_custom_call.1} parent=1 // pred_region
      %137 = dma.done [#allocation4], 64
    $region37: #{tpu_custom_call.1} parent=1 // pred_fallthru
      _
    %138 = vsyncpa [#allocation3], 1
    %139 = vsyncpa [#allocation6], 1
    %140 = vsyncpa [#allocation4], 1

</llo_original>
